<compile_context>
chip_gen: v7x
topology: tpu7x:2x2x1
jax: 0.10.0
libtpu: 0.0.40
codegen_flags: <defaults>
</compile_context>

<pallas_src>
import jax
import jax.numpy as jnp
from jax.experimental import pallas as pl
from jax.experimental.pallas import tpu as pltpu


def _round_up(a: int, b: int) -> int:
    return (a + b - 1) // b * b


def _grouped_conv_kernel(w_ref, b_ref, p_ref, o_ref):
    # w_ref: (1, OCg, K)   per-group weight matrix, VMEM-resident across M tiles
    # b_ref: (1, OCg, 1)   per-group bias (f32)
    # p_ref: (1, K, tm)    im2col patch tile (K on sublanes, M tile on lanes)
    # o_ref: (1, OCg, tm)  lane-dense output tile (f32)
    acc = jnp.dot(w_ref[0], p_ref[0], preferred_element_type=jnp.float32)
    o_ref[0] = (acc + b_ref[0]).astype(o_ref.dtype)


def grouped_conv2d(x, weight, bias, *, stride=1, padding=0, groups=2,
                   compute_dtype=jnp.bfloat16, tm_target=2048):
    """x: (N, C_in, H, W); weight: (C_out, C_in//groups, kH, kW); bias: (C_out,)."""
    N, C_in, H, W = x.shape
    C_out, Cg, kH, kW = weight.shape
    G = groups
    assert C_in % G == 0 and C_out % G == 0 and Cg == C_in // G
    OCg = C_out // G
    OH = (H + 2 * padding - kH) // stride + 1
    OW = (W + 2 * padding - kW) // stride + 1
    M = N * OH * OW
    K = Cg * kH * kW

    # ---- glue: im2col directly in the transposed (G, K, M) layout ------------
    x_pad = jnp.pad(x, ((0, 0), (0, 0), (padding, padding), (padding, padding)))
    slices = []
    for ki in range(kH):
        for kj in range(kW):
            slices.append(
                x_pad[:, :, ki:ki + stride * OH:stride, kj:kj + stride * OW:stride]
            )
    # (kH*kW, N, C_in, OH, OW) -> (kH, kW, N, G, Cg, OH, OW)
    patches = jnp.stack(slices, axis=0).reshape(kH, kW, N, G, Cg, OH, OW)
    # -> (G, Cg, kH, kW, N, OH, OW) -> (G, K, M); K order = (c, ki, kj), M = (n, oh, ow)
    patches = patches.transpose(3, 4, 0, 1, 2, 5, 6).reshape(G, K, M)

    # ---- pick the M tile and pad M to a multiple of it ------------------------
    M_pad = _round_up(M, 128)
    if M_pad <= tm_target:
        tm = M_pad
    else:
        tm = tm_target                       # multiple of 128 by construction
        M_pad = _round_up(M, tm)
    if M_pad != M:
        patches = jnp.pad(patches, ((0, 0), (0, 0), (0, M_pad - M)))
    num_m_tiles = M_pad // tm

    # bf16 MXU inputs (f32 accumulation inside the kernel), f32 bias / output.
    patches = patches.astype(compute_dtype)
    w_mat = weight.reshape(G, OCg, K).astype(compute_dtype)
    b_mat = bias.reshape(G, OCg, 1).astype(jnp.float32)

    # ---- VMEM budget & cost estimate ------------------------------------------
    in_bytes = jnp.dtype(compute_dtype).itemsize
    block_bytes = (OCg * K * in_bytes          # weight block
                   + OCg * 4                   # bias block
                   + K * tm * in_bytes         # patch tile
                   + OCg * tm * 4)             # output tile (f32)
    # Double-buffered blocks + headroom, clamped to a budget that is safe on
    # v5e (16 MiB scoped default) up through v7x (64 MiB physical).
    vmem_limit = int(min(max(3 * block_bytes, 32 * 1024 * 1024), 48 * 1024 * 1024))

    cost = pl.CostEstimate(
        flops=2 * G * M_pad * K * OCg,
        transcendentals=0,
        bytes_accessed=(G * K * M_pad * in_bytes      # patches read
                        + G * OCg * K * in_bytes      # weights read
                        + G * OCg * 4                 # bias read
                        + G * OCg * M_pad * 4),       # output write
    )

    # ---- hot path: Pallas kernel, grid = (group, M tile) ----------------------
    out = pl.pallas_call(
        _grouped_conv_kernel,
        out_shape=jax.ShapeDtypeStruct((G, OCg, M_pad), jnp.float32),
        grid=(G, num_m_tiles),
        in_specs=[
            pl.BlockSpec((1, OCg, K), lambda g, m: (g, 0, 0)),   # resident per group
            pl.BlockSpec((1, OCg, 1), lambda g, m: (g, 0, 0)),   # resident per group
            pl.BlockSpec((1, K, tm), lambda g, m: (g, 0, m)),    # streams over M
        ],
        out_specs=pl.BlockSpec((1, OCg, tm), lambda g, m: (g, 0, m)),
        compiler_params=pltpu.CompilerParams(
            dimension_semantics=("parallel", "parallel"),
            vmem_limit_bytes=vmem_limit,
        ),
        cost_estimate=cost,
    )(w_mat, b_mat, patches)

    # ---- glue: back to NCHW ----------------------------------------------------
    out = out[:, :, :M]                                   # drop M padding
    out = out.reshape(G, OCg, N, OH, OW)                  # M order = (n, oh, ow)
    out = out.transpose(2, 0, 1, 3, 4).reshape(N, C_out, OH, OW)
    return out


if __name__ == "__main__":
    # Module config: in_channels=4, out_channels=8, kernel_size=3,
    # stride=1, padding=1, bias=True, groups=2.
    N, C_in, H, W = 2, 4, 16, 16
    C_out, kH, kW = 8, 3, 3
    G, stride, padding = 2, 1, 1
    Cg = C_in // G

    key = jax.random.PRNGKey(0)
    kx, kw, kb = jax.random.split(key, 3)

    x = jax.random.normal(kx, (N, C_in, H, W), dtype=jnp.float32)

    # Deterministic init mimicking nn.Conv2d defaults: U(-1/sqrt(fan_in), 1/sqrt(fan_in))
    fan_in = Cg * kH * kW
    bound = 1.0 / (fan_in ** 0.5)
    weight = jax.random.uniform(kw, (C_out, Cg, kH, kW), jnp.float32, -bound, bound)
    bias = jax.random.uniform(kb, (C_out,), jnp.float32, -bound, bound)

    out = grouped_conv2d(x, weight, bias, stride=stride, padding=padding, groups=G)
    out = jax.block_until_ready(out)

    # Sanity check against XLA's grouped conv (f32 reference).
    ref = jax.lax.conv_general_dilated(
        x, weight,
        window_strides=(stride, stride),
        padding=[(padding, padding), (padding, padding)],
        dimension_numbers=("NCHW", "OIHW", "NCHW"),
        feature_group_count=G,
    ) + bias.reshape(1, -1, 1, 1)

    assert out.shape == (N, C_out, H, W), out.shape
    # bf16 MXU inputs with f32 accumulation -> loosened tolerance vs. the f32 reference.
    assert jnp.allclose(out, ref, atol=2e-2, rtol=2e-2), "mismatch vs reference conv"

    print("KERNEL_OK")
</pallas_src>

<mosaic_0001>
module attributes {stable_mosaic.version = 11 : i64} {
  func.func @_grouped_conv_kernel(%arg0: i32, %arg1: i32, %arg2: memref<1x4x18xbf16, #tpu.memory_space<vmem>>, %arg3: memref<1x4x1xf32, #tpu.memory_space<vmem>>, %arg4: memref<1x18x512xbf16, #tpu.memory_space<vmem>>, %arg5: memref<1x4x512xf32, #tpu.memory_space<vmem>>) attributes {dimension_semantics = [#tpu.dimension_semantics<parallel>, #tpu.dimension_semantics<parallel>], iteration_bounds = array<i64: 2, 1>, scalar_prefetch = 0 : i64, scratch_operands = 0 : i64, tpu.core_type = #tpu.core_type<tc>, window_params = [{transform_indices = @transform_0, window_bounds = array<i64: 1, 4, 18>}, {transform_indices = @transform_1, window_bounds = array<i64: 1, 4, 1>}, {transform_indices = @transform_2, window_bounds = array<i64: 1, 18, 512>}, {transform_indices = @transform_3, window_bounds = array<i64: 1, 4, 512>}]} {
    %c0 = arith.constant 0 : index
    %c0_0 = arith.constant 0 : index
    %c0_1 = arith.constant 0 : index
    %0 = vector.load %arg2[%c0, %c0_0, %c0_1] : memref<1x4x18xbf16, #tpu.memory_space<vmem>>, vector<1x4x18xbf16>
    %1 = vector.shape_cast %0 : vector<1x4x18xbf16> to vector<4x18xbf16>
    %c0_2 = arith.constant 0 : index
    %c0_3 = arith.constant 0 : index
    %c0_4 = arith.constant 0 : index
    %2 = vector.load %arg4[%c0_2, %c0_3, %c0_4] : memref<1x18x512xbf16, #tpu.memory_space<vmem>>, vector<1x18x512xbf16>
    %3 = vector.shape_cast %2 : vector<1x18x512xbf16> to vector<18x512xbf16>
    %cst = arith.constant dense<0.000000e+00> : vector<4x512xf32>
    %4 = tpu.matmul %1, %3, %cst {dimension_numbers = #tpu.dot_dimension_numbers<[1], [0], [0], [1], [0, 0, 1, 1], [], []>} : vector<4x18xbf16>, vector<18x512xbf16>, vector<4x512xf32> -> vector<4x512xf32>
    %c0_5 = arith.constant 0 : index
    %c0_6 = arith.constant 0 : index
    %c0_7 = arith.constant 0 : index
    %5 = vector.load %arg3[%c0_5, %c0_6, %c0_7] : memref<1x4x1xf32, #tpu.memory_space<vmem>>, vector<1x4x1xf32>
    %6 = vector.shape_cast %5 : vector<1x4x1xf32> to vector<4x1xf32>
    %7 = vector.broadcast %6 : vector<4x1xf32> to vector<4x512xf32>
    %8 = arith.addf %4, %7 : vector<4x512xf32>
    %c0_8 = arith.constant 0 : index
    %c0_9 = arith.constant 0 : index
    %c0_10 = arith.constant 0 : index
    %9 = vector.load %arg5[%c0_8, %c0_9, %c0_10] : memref<1x4x512xf32, #tpu.memory_space<vmem>>, vector<1x4x512xf32>
    %10 = vector.shape_cast %9 : vector<1x4x512xf32> to vector<4x512xf32>
    %11 = vector.shape_cast %8 : vector<4x512xf32> to vector<1x4x512xf32>
    tpu.vector_store %arg5[%c0_8, %c0_9, %c0_10], %11 {strides = array<i32>} : memref<1x4x512xf32, #tpu.memory_space<vmem>>, vector<1x4x512xf32>,
    return
  }
  func.func @transform_0(%arg0: i32, %arg1: i32) -> (i32, i32, i32) {
    %c0_i32 = arith.constant 0 : i32
    %c0_i32_0 = arith.constant 0 : i32
    %c0_i32_1 = arith.constant 0 : i32
    return %arg0, %c0_i32, %c0_i32_0 : i32, i32, i32
  }
  func.func @transform_1(%arg0: i32, %arg1: i32) -> (i32, i32, i32) {
    %c0_i32 = arith.constant 0 : i32
    %c0_i32_0 = arith.constant 0 : i32
    %c0_i32_1 = arith.constant 0 : i32
    return %arg0, %c0_i32, %c0_i32_0 : i32, i32, i32
  }
  func.func @transform_2(%arg0: i32, %arg1: i32) -> (i32, i32, i32) {
    %c0_i32 = arith.constant 0 : i32
    %c0_i32_0 = arith.constant 0 : i32
    return %arg0, %c0_i32, %arg1 : i32, i32, i32
  }
  func.func @transform_3(%arg0: i32, %arg1: i32) -> (i32, i32, i32) {
    %c0_i32 = arith.constant 0 : i32
    %c0_i32_0 = arith.constant 0 : i32
    return %arg0, %c0_i32, %arg1 : i32, i32, i32
  }
}

</mosaic_0001>

<llo_original>
// kernel: tpu_custom_call.1
$region0: #{tpu_custom_call.1}
  #allocation0 [shape = 'u32[]', space=smem, size = 0x4, offset = 0x4, fixed_abs, tag = 'smem constant byte address 0x4 - core index']
  #allocation1 [shape = 'u32[144,128]{1,0:T(1,128)}', space=vmem, size = 0x12000, scoped, tag = 'internal scratch']
  %s0 = inlined_call_operand.vmem [shape: bf16[2,4,18], index: 0, kind: input, shape index: {}]
  %s1 = inlined_call_operand.vmem [shape: f32[2,4,1], index: 1, kind: input, shape index: {}]
  %s2 = inlined_call_operand.vmem [shape: bf16[2,18,512], index: 2, kind: input, shape index: {}]
  %s3 = inlined_call_operand.hbm [shape: f32[2,4,512], index: 3, kind: output, shape index: {}]
  %s4 = sld [smem:[#allocation0]]
  $region45: #{tpu_custom_call.1} parent=0
    _
  %s6 = ssub.s32 1, %s4
  %s7 = scalar_select 0, %s6, %s4
  $region1: #{tpu_custom_call.1} parent=0
    #allocation2 [shape = 'u8[16384]{0}', space=vmem, size = 0x4000, scoped, tag = 'output window, operand 0']
    #allocation3 [shape = 's32[2]{0}', space=sflag, size = 0x8, scoped, tag = 'scoped memory for tpu_custom_call.1']
    %8 = vsyncpa [#allocation3], 0
    %s9 = scalar_lea.sflag [#allocation3], 1
    %10 = vsyncpa %s9, 0
    loop: start=0, step=1, limit=4
    $region2: #{tpu_custom_call.1} parent=1 // loop_pre_header
      _
    $region3: #{tpu_custom_call.1} parent=1 // loop_header
      %s12 = sphi 0, %s16
      %p13 = scmp.ge.s32.totalorder %s12, 4
      %s19 = sphi 0, %s31
      %s20 = sphi 0, %s27
      %s21 = sphi 0, %s19
      %s22 = sphi 0, %s20
      %s23 = sphi 0, %s21
      %s24 = sphi 0, %s22
      %s34 = sphi 0, %s36
      %s37 = sphi 0, %s34
      %s38 = sphi 0, %s37
      %s54 = sphi 0, %s38
      %s60 = sphi 0, %s62
      %s63 = sphi 0, %s60
      %s64 = sphi 0, %s63
      %s80 = sphi 0, %s64
      %s88 = sphi 0, %s90
      %s91 = sphi 0, %s88
      %s92 = sphi 0, %s91
      %s108 = sphi 0, %s92
      %s116 = sphi 0, %s118
      %s119 = sphi 0, %s116
      %s120 = sphi 0, %s119
      %s136 = sphi 0, %s120
    $region4: #{tpu_custom_call.1} parent=1 // loop_header_branch
      %15 = sbr.rel (%p13) target = $region8
    $region5: #{tpu_custom_call.1} parent=1 // loop_body
      %s17 = ssub.s32 %s12, 1
      %s18 = ssub.s32 %s12, 2
      %s25 = sadd.s32 1, %s20
      %p26 = scmp.ge.s32.totalorder %s25, 1
      %s27 = scalar_select %p26, 0, %s25
      %s28 = sadd.s32 1, %s19
      %s29 = scalar_select %p26, %s28, %s19
      %p30 = scmp.ge.s32.totalorder %s29, 2
      %s31 = scalar_select %p30, 0, %s29
      %s32 = ssub.s32 %s19, %s31
      %p33 = scmp.eq.s32.totalorder %s32, 0
      %s35 = sadd.s32 %s34, 1
      %s36 = scalar_select %p33, %s34, %s35
      %p39 = pneg %p33
      %p40 = scmp.eq.s32.totalorder %s12, 1
      %p41 = por %p39, %p40
      %p42 = scmp.ne.s32.totalorder %s34, %s37
      %p43 = scmp.eq.s32.totalorder %s12, 0
      %p44 = por %p42, %p43
      %p45 = scmp.ne.s32.totalorder %s34, %s37
      %p46 = scmp.eq.s32.totalorder %s17, 1
      %p47 = por %p45, %p46
      %p48 = scmp.ne.s32.totalorder %s37, %s38
      %p49 = scmp.eq.s32.totalorder %s17, 0
      %p50 = por %p48, %p49
      %p51 = scmp.ne.s32.totalorder %s37, %s38
      %p52 = scmp.eq.s32.totalorder %s18, 1
      %p53 = por %p51, %p52
      %p55 = scmp.ne.s32.totalorder %s38, %s54
      %p56 = scmp.eq.s32.totalorder %s18, 0
      %p57 = por %p55, %p56
      %s58 = ssub.s32 %s19, %s31
      %p59 = scmp.eq.s32.totalorder %s58, 0
      %s61 = sadd.s32 %s60, 1
      %s62 = scalar_select %p59, %s60, %s61
      %p65 = pneg %p59
      %p66 = scmp.eq.s32.totalorder %s12, 1
      %p67 = por %p65, %p66
      %p68 = scmp.ne.s32.totalorder %s60, %s63
      %p69 = scmp.eq.s32.totalorder %s12, 0
      %p70 = por %p68, %p69
      %p71 = scmp.ne.s32.totalorder %s60, %s63
      %p72 = scmp.eq.s32.totalorder %s17, 1
      %p73 = por %p71, %p72
      %p74 = scmp.ne.s32.totalorder %s63, %s64
      %p75 = scmp.eq.s32.totalorder %s17, 0
      %p76 = por %p74, %p75
      %p77 = scmp.ne.s32.totalorder %s63, %s64
      %p78 = scmp.eq.s32.totalorder %s18, 1
      %p79 = por %p77, %p78
      %p81 = scmp.ne.s32.totalorder %s64, %s80
      %p82 = scmp.eq.s32.totalorder %s18, 0
      %p83 = por %p81, %p82
      %s84 = ssub.s32 %s19, %s31
      %s85 = ssub.s32 %s20, %s27
      %s86 = sor.u32 %s84, %s85
      %p87 = scmp.eq.s32.totalorder %s86, 0
      %s89 = sadd.s32 %s88, 1
      %s90 = scalar_select %p87, %s88, %s89
      %p93 = pneg %p87
      %p94 = scmp.eq.s32.totalorder %s12, 1
      %p95 = por %p93, %p94
      %p96 = scmp.ne.s32.totalorder %s88, %s91
      %p97 = scmp.eq.s32.totalorder %s12, 0
      %p98 = por %p96, %p97
      %p99 = scmp.ne.s32.totalorder %s88, %s91
      %p100 = scmp.eq.s32.totalorder %s17, 1
      %p101 = por %p99, %p100
      %p102 = scmp.ne.s32.totalorder %s91, %s92
      %p103 = scmp.eq.s32.totalorder %s17, 0
      %p104 = por %p102, %p103
      %p105 = scmp.ne.s32.totalorder %s91, %s92
      %p106 = scmp.eq.s32.totalorder %s18, 1
      %p107 = por %p105, %p106
      %p109 = scmp.ne.s32.totalorder %s92, %s108
      %p110 = scmp.eq.s32.totalorder %s18, 0
      %p111 = por %p109, %p110
      %s112 = ssub.s32 %s19, %s31
      %s113 = ssub.s32 %s20, %s27
      %s114 = sor.u32 %s112, %s113
      %p115 = scmp.eq.s32.totalorder %s114, 0
      %s117 = sadd.s32 %s116, 1
      %s118 = scalar_select %p115, %s116, %s117
      %p121 = pneg %p115
      %p122 = scmp.eq.s32.totalorder %s12, 1
      %p123 = por %p121, %p122
      %p124 = scmp.ne.s32.totalorder %s116, %s119
      %p125 = scmp.eq.s32.totalorder %s12, 0
      %p126 = por %p124, %p125
      %p127 = scmp.ne.s32.totalorder %s116, %s119
      %p128 = scmp.eq.s32.totalorder %s17, 1
      %p129 = por %p127, %p128
      %p130 = scmp.ne.s32.totalorder %s119, %s120
      %p131 = scmp.eq.s32.totalorder %s17, 0
      %p132 = por %p130, %p131
      %p133 = scmp.ne.s32.totalorder %s119, %s120
      %p134 = scmp.eq.s32.totalorder %s18, 1
      %p135 = por %p133, %p134
      %p137 = scmp.ne.s32.totalorder %s120, %s136
      %p138 = scmp.eq.s32.totalorder %s18, 0
      %p139 = por %p137, %p138
      %p140 = scmp.le.s32.totalorder 1, %s12
      %p141 = scmp.lt.s32.totalorder %s12, 3
      %p142 = pnand %p140, %p141
      %p143 = pneg %p142
      // Predicated region
      $region9: #{tpu_custom_call.1} parent=5 // pred_check
        _
      $region10: #{tpu_custom_call.1} parent=5 // pred_check_branch
        %145 = sbr.rel (%p142) target = $region12
      $region11: #{tpu_custom_call.1} parent=5 // pred_region
        %s146 = ssub.s32 %s12, 1
      $region12: #{tpu_custom_call.1} parent=5 // pred_fallthru
        _
      %p147 = scmp.lt.s32.totalorder %s12, 2
      // Predicated region
      $region13: #{tpu_custom_call.1} parent=5 // pred_check
        %p148 = pneg %p147
      $region14: #{tpu_custom_call.1} parent=5 // pred_check_branch
        %150 = sbr.rel (%p148) target = $region16
      $region15: #{tpu_custom_call.1} parent=5 // pred_region
        // Predicated region
        $region17: #{tpu_custom_call.1} parent=15 // pred_check
          %p151 = pneg %p44
        $region18: #{tpu_custom_call.1} parent=15 // pred_check_branch
          %153 = sbr.rel (%p151) target = $region20
        $region19: #{tpu_custom_call.1} parent=15 // pred_region
          %p154 = scmp.lt.s32.totalorder %s19, 1
          %s155 = scalar_select %p154, %s19, 1
          %s156 = smul.addr %s155, 2
          %s157 = scalar_lea.vmem %s0, %s156
        $region20: #{tpu_custom_call.1} parent=15 // pred_fallthru
          _
        // Predicated region
        $region21: #{tpu_custom_call.1} parent=15 // pred_check
          %p158 = pneg %p70
        $region22: #{tpu_custom_call.1} parent=15 // pred_check_branch
          %160 = sbr.rel (%p158) target = $region24
        $region23: #{tpu_custom_call.1} parent=15 // pred_region
          %p161 = scmp.lt.s32.totalorder %s19, 1
          %s162 = scalar_select %p161, %s19, 1
          %s163 = smul.addr %s162, 4
          %s164 = scalar_lea.vmem %s1, %s163
        $region24: #{tpu_custom_call.1} parent=15 // pred_fallthru
          _
        // Predicated region
        $region25: #{tpu_custom_call.1} parent=15 // pred_check
          %p165 = pneg %p98
        $region26: #{tpu_custom_call.1} parent=15 // pred_check_branch
          %167 = sbr.rel (%p165) target = $region28
        $region27: #{tpu_custom_call.1} parent=15 // pred_region
          %s168 = smul.u32 4, %s20
          %p169 = scmp.lt.s32.totalorder %s19, 1
          %s170 = scalar_select %p169, %s19, 1
          %p171 = scmp.lt.s32.totalorder %s168, 3
          %s172 = scalar_select %p171, %s168, 3
          %s173 = smul.addr %s170, 12
          %s174 = sadd.s32 %s172, %s173
          %s175 = smul.addr %s174, 4
          %s176 = scalar_lea.vmem %s2, %s175
          %s177 = smul.u32 4, %s20
        $region28: #{tpu_custom_call.1} parent=15 // pred_fallthru
          _
      $region16: #{tpu_custom_call.1} parent=5 // pred_fallthru
        _
      %p178 = scmp.le.s32.totalorder 1, %s12
      %p179 = scmp.lt.s32.totalorder %s12, 3
      %p180 = pnand %p178, %p179
      %p181 = pneg %p180
      // Predicated region
      $region29: #{tpu_custom_call.1} parent=5 // pred_check
        _
      $region30: #{tpu_custom_call.1} parent=5 // pred_check_branch
        %183 = sbr.rel (%p180) target = $region32
      $region31: #{tpu_custom_call.1} parent=5 // pred_region
        %s184 = ssub.s32 %s12, 1
        %p185 = scmp.lt.s32.totalorder %s21, 1
        %s186 = scalar_select %p185, %s21, 1
        %s187 = smul.addr %s186, 2
        %s188 = scalar_lea.vmem %s0, %s187
        %p189 = pneg %p50
        %p190 = pneg %p47
        %p191 = scmp.lt.s32.totalorder %s21, 1
        %s192 = scalar_select %p191, %s21, 1
        %s193 = smul.addr %s192, 4
        %s194 = scalar_lea.vmem %s1, %s193
        %p195 = pneg %p76
        %p196 = pneg %p73
        %s197 = smul.u32 4, %s22
        %p198 = scmp.lt.s32.totalorder %s21, 1
        %s199 = scalar_select %p198, %s21, 1
        %p200 = scmp.lt.s32.totalorder %s197, 3
        %s201 = scalar_select %p200, %s197, 3
        %s202 = smul.addr %s199, 12
        %s203 = sadd.s32 %s201, %s202
        %s204 = smul.addr %s203, 4
        %s205 = scalar_lea.vmem %s2, %s204
        %p206 = pneg %p104
        %p207 = pneg %p101
        %p208 = pneg %p132
        %p209 = pneg %p129
        %s210 = sand.u32 %s119, 1
        %s211 = scalar_lea.sflag [#allocation3], %s210
        %s212 = sand.u32 %s119, 1
        %s213 = smul.addr %s212, 16
        %s214 = scalar_lea.vmem [#allocation2], %s213
        %p215 = scmp.lt.s32.totalorder %s21, 1
        %s216 = scalar_select %p215, %s21, 1
        %s217 = smul.addr %s216, 2
        %s218 = scalar_lea.vmem %s0, %s217
        %p219 = scmp.lt.s32.totalorder %s21, 1
        %s220 = scalar_select %p219, %s21, 1
        %s221 = smul.addr %s220, 4
        %s222 = scalar_lea.vmem %s1, %s221
        %s223 = smul.u32 4, %s22
        %p224 = scmp.lt.s32.totalorder %s21, 1
        %s225 = scalar_select %p224, %s21, 1
        %p226 = scmp.lt.s32.totalorder %s223, 3
        %s227 = scalar_select %p226, %s223, 3
        %s228 = smul.addr %s225, 12
        %s229 = sadd.s32 %s227, %s228
        %s230 = smul.addr %s229, 4
        %s231 = scalar_lea.vmem %s2, %s230
        %s232 = smul.u32 4, %s22
        %s233 = smul.u32 4, %s22
        %v235 = vld [vmem:[%s218] sm:$0x3]
        %v236 = vld [vmem:[%s231] sm:$0xff]
        %v237 = vld [vmem:[%s231 + $0x8] sm:$0xff]
        %v238 = vld [vmem:[%s231 + $0x10] sm:$0xff]
        %v239 = vld [vmem:[%s231 + $0x18] sm:$0xff]
        %v240 = vld [vmem:[%s231 + $0x20] sm:$0x11]
        %v241 = vld [vmem:[%s231 + $0x28] sm:$0x11]
        %v242 = vld [vmem:[%s222] sm:$0xf]
        %244 = vset.pattern.permute.xlu0 0
        %245 = vperm.xlu0 %244, %v242
        %v246 = vpop.permute.xlu0 %245
        %v254 = vunpack.c.l.b16 %v236
        %v255 = vunpack.c.h.b16 %v236
        %v256 = vunpack.c.l.b16 %v237
        %v257 = vunpack.c.h.b16 %v237
        %v258 = vunpack.c.l.b16 %v238
        %v259 = vunpack.c.h.b16 %v238
        %v260 = vunpack.c.l.b16 %v239
        %v261 = vunpack.c.h.b16 %v239
        %v262 = vunpack.c.l.b16 %v240
        %v263 = vunpack.c.h.b16 %v240
        %v264 = vunpack.c.l.b16 %v241
        %v265 = vunpack.c.h.b16 %v241
        %v266 = vpack.c.b16 %v258, %v254
        %v267 = vpack.c.b16 %v259, %v255
        %v268 = vpack.c.b16 %v260, %v256
        %v269 = vpack.c.b16 %v261, %v257
        %v270 = vpack.c.b16 %v262, %v262
        %v271 = vpack.c.b16 %v263, %v263
        %v272 = vpack.c.b16 %v264, %v264
        %v273 = vpack.c.b16 %v265, %v265
        %vm278 = vcmask 146432
        %v280 = vsel %vm278, %v235, 0
        %vm282 = vcmask 1040384
        %v284 = vsel %vm282, %v270, 0
        %v287 = vsel %vm282, %v271, 0
        %v290 = vsel %vm282, %v272, 0
        %v293 = vsel %vm282, %v273, 0
        %295 = vmatprep.subr.bf16.mxu0 %v267
        %296 = vmatpush1.bf16.msra.mxu0 %v266
        %297 = vmatprep.subr.bf16.mxu0 %v287
        %298 = vmatpush1.bf16.msra.mxu0 %v284
        %299 = vmatprep.subr.bf16.mxu0 0
        %300 = vmatpush1.bf16.msra.mxu0 0
        %301 = vmatprep.subr.bf16.mxu0 0
        %302 = vmatpush1.bf16.msra.mxu0 0
        %303 = vmatprep.subr.bf16.mxu0 0
        %304 = vmatpush1.bf16.msra.mxu0 0
        %305 = vmatprep.subr.bf16.mxu0 0
        %306 = vmatpush1.bf16.msra.mxu0 0
        %307 = vmatprep.subr.bf16.mxu0 0
        %308 = vmatpush1.bf16.msra.mxu0 0
        %309 = vmatprep.subr.bf16.mxu0 0
        %310 = vmatpush1.bf16.msra.mxu0 0
        %311 = vmatprep.subr.bf16.mxu0 0
        %312 = vmatpush1.bf16.msra.mxu0 0
        %313 = vmatprep.subr.bf16.mxu0 0
        %314 = vmatpush1.bf16.msra.mxu0 0
        %315 = vmatprep.subr.bf16.mxu0 0
        %316 = vmatpush1.bf16.msra.mxu0 0
        %317 = vmatprep.subr.bf16.mxu0 0
        %318 = vmatpush1.bf16.msra.mxu0 0
        %319 = vmatprep.subr.bf16.mxu0 0
        %320 = vmatpush1.bf16.msra.mxu0 0
        %321 = vmatprep.subr.bf16.mxu0 0
        %322 = vmatpush1.bf16.msra.mxu0 0
        %323 = vmatprep.subr.bf16.mxu0 0
        %324 = vmatpush1.bf16.msra.mxu0 0
        %325 = vmatprep.subr.bf16.mxu0 0
        %326 = vmatpush1.bf16.msra.mxu0 0
        %327 = vmatprep.mubr.bf16.mxu0 0
        %328 = vmatmul.mubr.bf16.gmra.mrb[0].mxu0 %v280
        %v329 = vpop.f32.mrb[0].mxu0
        %v330 = vadd.f32 %v246, %v329
        %v331 = vpop.f32.mrb[0].mxu0
        %v332 = vadd.f32 %v246, %v331
        %v333 = vpop.f32.mrb[0].mxu0
        %v334 = vpop.f32.mrb[0].mxu0
        %335 = vdwg.mxu0
        %336 = vmatprep.subr.bf16.mxu0 %v269
        %337 = vmatpush1.bf16.msra.mxu0 %v268
        %338 = vmatprep.subr.bf16.mxu0 %v293
        %339 = vmatpush1.bf16.msra.mxu0 %v290
        %340 = vmatprep.subr.bf16.mxu0 0
        %341 = vmatpush1.bf16.msra.mxu0 0
        %342 = vmatprep.subr.bf16.mxu0 0
        %343 = vmatpush1.bf16.msra.mxu0 0
        %344 = vmatprep.subr.bf16.mxu0 0
        %345 = vmatpush1.bf16.msra.mxu0 0
        %346 = vmatprep.subr.bf16.mxu0 0
        %347 = vmatpush1.bf16.msra.mxu0 0
        %348 = vmatprep.subr.bf16.mxu0 0
        %349 = vmatpush1.bf16.msra.mxu0 0
        %350 = vmatprep.subr.bf16.mxu0 0
        %351 = vmatpush1.bf16.msra.mxu0 0
        %352 = vmatprep.subr.bf16.mxu0 0
        %353 = vmatpush1.bf16.msra.mxu0 0
        %354 = vmatprep.subr.bf16.mxu0 0
        %355 = vmatpush1.bf16.msra.mxu0 0
        %356 = vmatprep.subr.bf16.mxu0 0
        %357 = vmatpush1.bf16.msra.mxu0 0
        %358 = vmatprep.subr.bf16.mxu0 0
        %359 = vmatpush1.bf16.msra.mxu0 0
        %360 = vmatprep.subr.bf16.mxu0 0
        %361 = vmatpush1.bf16.msra.mxu0 0
        %362 = vmatprep.subr.bf16.mxu0 0
        %363 = vmatpush1.bf16.msra.mxu0 0
        %364 = vmatprep.subr.bf16.mxu0 0
        %365 = vmatpush1.bf16.msra.mxu0 0
        %366 = vmatprep.subr.bf16.mxu0 0
        %367 = vmatpush1.bf16.msra.mxu0 0
        %368 = vmatprep.mubr.bf16.mxu0 0
        %369 = vmatmul.mubr.bf16.gmra.mrb[0].mxu0 %v280
        %v370 = vpop.f32.mrb[0].mxu0
        %v371 = vadd.f32 %v246, %v370
        %v372 = vpop.f32.mrb[0].mxu0
        %v373 = vadd.f32 %v246, %v372
        %v374 = vpop.f32.mrb[0].mxu0
        %v375 = vpop.f32.mrb[0].mxu0
        %376 = vdwg.mxu0
        %v381 = vcombine.low %v330, %v332
        %v382 = vcombine.low %v371, %v373
        %385 = vst [vmem:[%s214] sm:$0xff] %v381
        %386 = vst [vmem:[%s214 + $0x8] sm:$0xff] %v382
        %s387 = sand.u32 %s119, 1
        %s388 = scalar_lea.sflag [#allocation3], %s387
        %s389 = sand.u32 %s119, 1
        %s390 = smul.addr %s389, 16
        %s391 = scalar_lea.vmem [#allocation2], %s390
        // Predicated region
        $region33: #{tpu_custom_call.1} parent=31 // pred_check
          %p392 = pneg %p129
        $region34: #{tpu_custom_call.1} parent=31 // pred_check_branch
          %394 = sbr.rel (%p392) target = $region36
        $region35: #{tpu_custom_call.1} parent=31 // pred_region
          %s395 = smul.u32 4, %s22
          %s397 = ssub.s32 256, 256
          %398 = vsyncadd %s388, %s397
          %s399 = smul.addr %s21, 4
          %s400 = sadd.s32 %s395, %s399
          %s401 = smul.addr %s400, 64
          %s402 = scalar_lea.hbm %s3, %s401
          %s404 = sshll.u32 %s391, 4
          %s405 = int_to_ptr.vmem [resolvable:$true] %s404
          %407 = dma.vmem_to_hbm [thread:$0]  %s405, 256, %s402, %s388
        $region36: #{tpu_custom_call.1} parent=31 // pred_fallthru
          _
      $region32: #{tpu_custom_call.1} parent=5 // pred_fallthru
        _
      %p408 = scmp.le.s32.totalorder 2, %s12
      // Predicated region
      $region37: #{tpu_custom_call.1} parent=5 // pred_check
        %p409 = pneg %p408
      $region38: #{tpu_custom_call.1} parent=5 // pred_check_branch
        %411 = sbr.rel (%p409) target = $region40
      $region39: #{tpu_custom_call.1} parent=5 // pred_region
        %s412 = ssub.s32 %s12, 2
        // Predicated region
        $region41: #{tpu_custom_call.1} parent=39 // pred_check
          %p413 = pneg %p135
        $region42: #{tpu_custom_call.1} parent=39 // pred_check_branch
          %415 = sbr.rel (%p413) target = $region44
        $region43: #{tpu_custom_call.1} parent=39 // pred_region
          %s416 = sand.u32 %s120, 1
          %s417 = scalar_lea.sflag [#allocation3], %s416
          %s418 = sand.u32 %s120, 1
          %s419 = smul.addr %s418, 16
          %s420 = scalar_lea.vmem [#allocation2], %s419
          %421 = dma.done %s417, 256
        $region44: #{tpu_custom_call.1} parent=39 // pred_fallthru
          _
      $region40: #{tpu_custom_call.1} parent=5 // pred_fallthru
        _
    $region6: #{tpu_custom_call.1} parent=1 // loop_footer
      %s16 = sadd.s32 1, %s12
    $region7: #{tpu_custom_call.1} parent=1 // loop_footer_branch
      %11 = sbr.rel target = $region3
    $region8: #{tpu_custom_call.1} parent=1 // loop_exit
      _
    %422 = vsyncpa [#allocation3], 1
    %s423 = scalar_lea.sflag [#allocation3], 1
    %424 = vsyncpa %s423, 1

</llo_original>
